<compile_context>
chip_gen: v6e
topology: v6e:2x2x1
jax: 0.10.0
libtpu: 0.0.40
codegen_flags: <defaults>
</compile_context>

<pallas_src>
import jax
import jax.numpy as jnp
from jax import lax
from jax.experimental import pallas as pl
from jax.experimental.pallas import tpu as pltpu

CIN, COUT, KH, KW = 3, 8, 3, 3
K = CIN * KH * KW          # 27 real contraction rows
K_PAD = 32                 # padded contraction dim (cols 27..31 of the weight are 0)
NEG_SLOPE = 0.1
MAX_TILE_COLS = 16384      # lane-dense column tile cap (multiple of 128)


def _make_kernel(tile_cols, wp):
    """tile_cols: columns per grid step; wp = W + 2 (padded row stride)."""

    def kernel(w_ref, b_ref, x_ref, o_ref, p_ref):
        # w_ref: (COUT, K_PAD)           conv weight, rows ordered (dy, dx, ci)
        # b_ref: (COUT, 1)               bias
        # x_ref: (CIN, tile_cols + halo) flattened (H+1+1, W+1+1)-padded input tile
        # o_ref: (COUT, tile_cols)       output tile (flat columns, stride wp per row)
        # p_ref: (K_PAD, tile_cols)      patch scratch (fused im2col)

        # Rows K..K_PAD-1 multiply zero weight columns, but 0 * garbage can be
        # NaN, so keep them zeroed (scratch is per-core and uninitialized).
        p_ref[K:K_PAD, :] = jnp.zeros((K_PAD - K, tile_cols), jnp.float32)

        # Fused im2col: tap (dy, dx) of flat output column c is flat input
        # element c + dy*wp + dx -> a static lane-shifted slice (XLU-side work,
        # which has slack here).
        for tap in range(KH * KW):
            dy, dx = divmod(tap, KW)
            off = dy * wp + dx
            p_ref[CIN * tap:CIN * tap + CIN, :] = x_ref[:, off:off + tile_cols]

        acc = jnp.dot(w_ref[...], p_ref[...], preferred_element_type=jnp.float32)
        acc = acc + b_ref[...]                                 # lane-broadcast bias
        o_ref[...] = jnp.maximum(acc, acc * NEG_SLOPE).astype(o_ref.dtype)

    return kernel


def model_forward(x, w_t, bias):
    """x: (N, CIN, H, W) f32; w_t: ConvTranspose2d weight (CIN, COUT, KH, KW);
    bias: (COUT,). Returns (N, COUT, H, W) (stride=1, padding=1 keeps H, W)."""
    N, Cin, H, W = x.shape
    assert Cin == CIN
    assert w_t.shape == (CIN, COUT, KH, KW)
    assert bias.shape == (COUT,)

    # ConvTranspose2d(stride=1, padding=1) == direct conv (padding=1) with the
    # kernel spatially flipped and in/out channels swapped.
    w_conv = jnp.transpose(w_t, (1, 0, 2, 3))[:, :, ::-1, ::-1]        # (COUT, CIN, KH, KW)
    # Patch-row ordering in the kernel is (dy, dx, ci).
    w_mat = jnp.transpose(w_conv, (0, 2, 3, 1)).reshape(COUT, K).astype(jnp.float32)
    w_aug = jnp.concatenate([w_mat, jnp.zeros((COUT, K_PAD - K), jnp.float32)], axis=1)
    b_col = bias.reshape(COUT, 1).astype(jnp.float32)

    # Pad H and W by 1 and flatten the padded spatial dims.  With flat output
    # columns c = h*(W+2) + w, every conv tap is a uniform flat shift
    # c + dy*(W+2) + dx (2 junk columns per row are sliced away at the end),
    # so the kernel needs no edge masks.
    wp = W + 2
    halo = 2 * wp + 2
    cols = H * wp                           # flat output columns incl. 2 junk/row

    x_pad = jnp.pad(x.astype(jnp.float32), ((0, 0), (0, 0), (1, 1), (1, 1)))
    x_flat = x_pad.reshape(N, CIN, (H + 2) * wp)

    # Column tiling: lane-dense (multiple of 128); ensure >= 2 total parallel
    # grid steps when possible so v7x's two TensorCores both get work.
    cols128 = pl.cdiv(cols, 128) * 128
    tile_cols = min(MAX_TILE_COLS, cols128)
    if N * pl.cdiv(cols128, tile_cols) < 2 and cols128 >= 256:
        tile_cols = pl.cdiv(cols128 // 128, 2) * 128
    n_tiles = pl.cdiv(cols128, tile_cols)
    cols_padded = n_tiles * tile_cols

    # Zero-pad the flat input so every tile can read tile_cols + halo elements,
    # then build the per-tile (halo-overlapping) views once.  This is a single
    # ~1x copy of x, vs the ~10x materialized im2col of the previous version.
    x_flat = jnp.pad(x_flat, ((0, 0), (0, 0),
                              (0, cols_padded + halo - (H + 2) * wp)))
    x_tiles = jnp.stack(
        [x_flat[:, :, j * tile_cols: j * tile_cols + tile_cols + halo]
         for j in range(n_tiles)], axis=1)          # (N, n_tiles, CIN, tile_cols+halo)

    kernel = _make_kernel(tile_cols, wp)
    out_flat = pl.pallas_call(
        kernel,
        out_shape=jax.ShapeDtypeStruct((N, COUT, cols_padded), jnp.float32),
        grid_spec=pltpu.PrefetchScalarGridSpec(
            num_scalar_prefetch=0,
            grid=(N, n_tiles),
            in_specs=[
                pl.BlockSpec((COUT, K_PAD), lambda n, j: (0, 0)),      # weight, resident
                pl.BlockSpec((COUT, 1), lambda n, j: (0, 0)),          # bias, resident
                pl.BlockSpec((None, None, CIN, tile_cols + halo),
                             lambda n, j: (n, j, 0, 0)),               # input tile (fused im2col)
            ],
            out_specs=pl.BlockSpec((None, COUT, tile_cols), lambda n, j: (n, 0, j)),
            scratch_shapes=[pltpu.VMEM((K_PAD, tile_cols), jnp.float32)],
        ),
        compiler_params=pltpu.CompilerParams(
            dimension_semantics=("parallel", "parallel")),
    )(w_aug, b_col, x_tiles)

    # NCHW falls out directly: strip column padding and the 2 junk cols/row.
    out = out_flat[:, :, :cols].reshape(N, COUT, H, wp)[:, :, :, :W]
    return out


def reference_forward(x, w_t, bias):
    """Independent reference: direct transcription of the ConvTranspose2d
    (stride=1, padding=1) definition + leaky epilogue."""
    N, Cin, H, W = x.shape
    xp = jnp.pad(x.astype(jnp.float32), ((0, 0), (0, 0), (1, 1), (1, 1)))
    y = jnp.broadcast_to(bias.reshape(1, COUT, 1, 1).astype(jnp.float32),
                         (N, COUT, H, W))
    # y[n,co,h,w] = bias[co] + sum_{ci,kh,kw} x[n,ci,h+1-kh,w+1-kw] * w_t[ci,co,kh,kw]
    for kh in range(KH):
        for kw in range(KW):
            patch = xp[:, :, 2 - kh:2 - kh + H, 2 - kw:2 - kw + W]
            y = y + jnp.einsum('nchw,co->nohw', patch, w_t[:, :, kh, kw],
                               precision=lax.Precision.HIGHEST)
    return jnp.where(y > 0, y, y * NEG_SLOPE)


if __name__ == "__main__":
    key = jax.random.PRNGKey(0)
    kx, kw, kb = jax.random.split(key, 3)

    # deterministic parameters (ConvTranspose2d weight is (Cin, Cout, KH, KW))
    w_t = jax.random.normal(kw, (CIN, COUT, KH, KW), dtype=jnp.float32) * 0.1
    bias = jax.random.normal(kb, (COUT,), dtype=jnp.float32) * 0.1

    # small multi-batch shape: grid (2, 1) -> two parallel steps
    N, H, W = 2, 16, 16
    x_small = jax.random.normal(kx, (N, CIN, H, W), dtype=jnp.float32)
    out = jax.block_until_ready(model_forward(x_small, w_t, bias))
    ref = jax.block_until_ready(reference_forward(x_small, w_t, bias))
    assert out.shape == (N, COUT, H, W)
    assert jnp.allclose(out, ref, atol=2e-4, rtol=2e-4), \
        float(jnp.max(jnp.abs(out - ref)))

    # spec shape (1, 3, 64, 64): two lane-dense 2176-wide parallel column tiles
    x_spec = jax.random.normal(kx, (1, CIN, 64, 64), dtype=jnp.float32)
    out2 = jax.block_until_ready(model_forward(x_spec, w_t, bias))
    ref2 = jax.block_until_ready(reference_forward(x_spec, w_t, bias))
    assert out2.shape == (1, COUT, 64, 64)
    assert jnp.allclose(out2, ref2, atol=2e-4, rtol=2e-4), \
        float(jnp.max(jnp.abs(out2 - ref2)))

    print("KERNEL_OK")
</pallas_src>

<mosaic_0001>
module attributes {stable_mosaic.version = 11 : i64} {
  func.func @kernel(%arg0: i32, %arg1: i32, %arg2: memref<8x32xf32, #tpu.memory_space<vmem>>, %arg3: memref<8x1xf32, #tpu.memory_space<vmem>>, %arg4: memref<1x1x3x422xf32, #tpu.memory_space<vmem>>, %arg5: memref<1x8x384xf32, #tpu.memory_space<vmem>>, %arg6: memref<32x384xf32, #tpu.memory_space<vmem>>) attributes {dimension_semantics = [#tpu.dimension_semantics<parallel>, #tpu.dimension_semantics<parallel>], iteration_bounds = array<i64: 2, 1>, scalar_prefetch = 0 : i64, scratch_operands = 1 : i64, tpu.core_type = #tpu.core_type<tc>, window_params = [{pipeline_mode = #tpu.pipeline_mode<synchronous>, transform_indices = @transform_0, window_bounds = array<i64: 8, 32>}, {pipeline_mode = #tpu.pipeline_mode<synchronous>, transform_indices = @transform_1, window_bounds = array<i64: 8, 1>}, {transform_indices = @transform_2, window_bounds = array<i64: 1, 1, 3, 422>}, {transform_indices = @transform_3, window_bounds = array<i64: 1, 8, 384>}]} {
    %cst = arith.constant 0.000000e+00 : f32
    %0 = vector.broadcast %cst : f32 to vector<5x384xf32>
    %c27 = arith.constant 27 : index
    %c0 = arith.constant 0 : index
    %1 = vector.load %arg6[%c27, %c0] : memref<32x384xf32, #tpu.memory_space<vmem>>, vector<5x384xf32>
    tpu.vector_store %arg6[%c27, %c0], %0 {strides = array<i32>} : memref<32x384xf32, #tpu.memory_space<vmem>>, vector<5x384xf32>,
    %c0_0 = arith.constant 0 : index
    %c0_1 = arith.constant 0 : index
    %c0_2 = arith.constant 0 : index
    %c0_3 = arith.constant 0 : index
    %2 = vector.load %arg4[%c0_0, %c0_1, %c0_2, %c0_3] : memref<1x1x3x422xf32, #tpu.memory_space<vmem>>, vector<1x1x3x384xf32>
    %3 = vector.shape_cast %2 : vector<1x1x3x384xf32> to vector<3x384xf32>
    %c0_4 = arith.constant 0 : index
    %c0_5 = arith.constant 0 : index
    %4 = vector.load %arg6[%c0_4, %c0_5] : memref<32x384xf32, #tpu.memory_space<vmem>>, vector<3x384xf32>
    tpu.vector_store %arg6[%c0_4, %c0_5], %3 {strides = array<i32>} : memref<32x384xf32, #tpu.memory_space<vmem>>, vector<3x384xf32>,
    %c0_6 = arith.constant 0 : index
    %c0_7 = arith.constant 0 : index
    %c0_8 = arith.constant 0 : index
    %c1 = arith.constant 1 : index
    %5 = vector.load %arg4[%c0_6, %c0_7, %c0_8, %c1] : memref<1x1x3x422xf32, #tpu.memory_space<vmem>>, vector<1x1x3x384xf32>
    %6 = vector.shape_cast %5 : vector<1x1x3x384xf32> to vector<3x384xf32>
    %c3 = arith.constant 3 : index
    %c0_9 = arith.constant 0 : index
    %7 = vector.load %arg6[%c3, %c0_9] : memref<32x384xf32, #tpu.memory_space<vmem>>, vector<3x384xf32>
    tpu.vector_store %arg6[%c3, %c0_9], %6 {strides = array<i32>} : memref<32x384xf32, #tpu.memory_space<vmem>>, vector<3x384xf32>,
    %c0_10 = arith.constant 0 : index
    %c0_11 = arith.constant 0 : index
    %c0_12 = arith.constant 0 : index
    %c2 = arith.constant 2 : index
    %8 = vector.load %arg4[%c0_10, %c0_11, %c0_12, %c2] : memref<1x1x3x422xf32, #tpu.memory_space<vmem>>, vector<1x1x3x384xf32>
    %9 = vector.shape_cast %8 : vector<1x1x3x384xf32> to vector<3x384xf32>
    %c6 = arith.constant 6 : index
    %c0_13 = arith.constant 0 : index
    %10 = vector.load %arg6[%c6, %c0_13] : memref<32x384xf32, #tpu.memory_space<vmem>>, vector<3x384xf32>
    tpu.vector_store %arg6[%c6, %c0_13], %9 {strides = array<i32>} : memref<32x384xf32, #tpu.memory_space<vmem>>, vector<3x384xf32>,
    %c0_14 = arith.constant 0 : index
    %c0_15 = arith.constant 0 : index
    %c0_16 = arith.constant 0 : index
    %c18 = arith.constant 18 : index
    %11 = vector.load %arg4[%c0_14, %c0_15, %c0_16, %c18] : memref<1x1x3x422xf32, #tpu.memory_space<vmem>>, vector<1x1x3x384xf32>
    %12 = vector.shape_cast %11 : vector<1x1x3x384xf32> to vector<3x384xf32>
    %c9 = arith.constant 9 : index
    %c0_17 = arith.constant 0 : index
    %13 = vector.load %arg6[%c9, %c0_17] : memref<32x384xf32, #tpu.memory_space<vmem>>, vector<3x384xf32>
    tpu.vector_store %arg6[%c9, %c0_17], %12 {strides = array<i32>} : memref<32x384xf32, #tpu.memory_space<vmem>>, vector<3x384xf32>,
    %c0_18 = arith.constant 0 : index
    %c0_19 = arith.constant 0 : index
    %c0_20 = arith.constant 0 : index
    %c19 = arith.constant 19 : index
    %14 = vector.load %arg4[%c0_18, %c0_19, %c0_20, %c19] : memref<1x1x3x422xf32, #tpu.memory_space<vmem>>, vector<1x1x3x384xf32>
    %15 = vector.shape_cast %14 : vector<1x1x3x384xf32> to vector<3x384xf32>
    %c12 = arith.constant 12 : index
    %c0_21 = arith.constant 0 : index
    %16 = vector.load %arg6[%c12, %c0_21] : memref<32x384xf32, #tpu.memory_space<vmem>>, vector<3x384xf32>
    tpu.vector_store %arg6[%c12, %c0_21], %15 {strides = array<i32>} : memref<32x384xf32, #tpu.memory_space<vmem>>, vector<3x384xf32>,
    %c0_22 = arith.constant 0 : index
    %c0_23 = arith.constant 0 : index
    %c0_24 = arith.constant 0 : index
    %c20 = arith.constant 20 : index
    %17 = vector.load %arg4[%c0_22, %c0_23, %c0_24, %c20] : memref<1x1x3x422xf32, #tpu.memory_space<vmem>>, vector<1x1x3x384xf32>
    %18 = vector.shape_cast %17 : vector<1x1x3x384xf32> to vector<3x384xf32>
    %c15 = arith.constant 15 : index
    %c0_25 = arith.constant 0 : index
    %19 = vector.load %arg6[%c15, %c0_25] : memref<32x384xf32, #tpu.memory_space<vmem>>, vector<3x384xf32>
    tpu.vector_store %arg6[%c15, %c0_25], %18 {strides = array<i32>} : memref<32x384xf32, #tpu.memory_space<vmem>>, vector<3x384xf32>,
    %c0_26 = arith.constant 0 : index
    %c0_27 = arith.constant 0 : index
    %c0_28 = arith.constant 0 : index
    %c36 = arith.constant 36 : index
    %20 = vector.load %arg4[%c0_26, %c0_27, %c0_28, %c36] : memref<1x1x3x422xf32, #tpu.memory_space<vmem>>, vector<1x1x3x384xf32>
    %21 = vector.shape_cast %20 : vector<1x1x3x384xf32> to vector<3x384xf32>
    %c18_29 = arith.constant 18 : index
    %c0_30 = arith.constant 0 : index
    %22 = vector.load %arg6[%c18_29, %c0_30] : memref<32x384xf32, #tpu.memory_space<vmem>>, vector<3x384xf32>
    tpu.vector_store %arg6[%c18_29, %c0_30], %21 {strides = array<i32>} : memref<32x384xf32, #tpu.memory_space<vmem>>, vector<3x384xf32>,
    %c0_31 = arith.constant 0 : index
    %c0_32 = arith.constant 0 : index
    %c0_33 = arith.constant 0 : index
    %c37 = arith.constant 37 : index
    %23 = vector.load %arg4[%c0_31, %c0_32, %c0_33, %c37] : memref<1x1x3x422xf32, #tpu.memory_space<vmem>>, vector<1x1x3x384xf32>
    %24 = vector.shape_cast %23 : vector<1x1x3x384xf32> to vector<3x384xf32>
    %c21 = arith.constant 21 : index
    %c0_34 = arith.constant 0 : index
    %25 = vector.load %arg6[%c21, %c0_34] : memref<32x384xf32, #tpu.memory_space<vmem>>, vector<3x384xf32>
    tpu.vector_store %arg6[%c21, %c0_34], %24 {strides = array<i32>} : memref<32x384xf32, #tpu.memory_space<vmem>>, vector<3x384xf32>,
    %c0_35 = arith.constant 0 : index
    %c0_36 = arith.constant 0 : index
    %c0_37 = arith.constant 0 : index
    %c38 = arith.constant 38 : index
    %26 = vector.load %arg4[%c0_35, %c0_36, %c0_37, %c38] : memref<1x1x3x422xf32, #tpu.memory_space<vmem>>, vector<1x1x3x384xf32>
    %27 = vector.shape_cast %26 : vector<1x1x3x384xf32> to vector<3x384xf32>
    %c24 = arith.constant 24 : index
    %c0_38 = arith.constant 0 : index
    %28 = vector.load %arg6[%c24, %c0_38] : memref<32x384xf32, #tpu.memory_space<vmem>>, vector<3x384xf32>
    tpu.vector_store %arg6[%c24, %c0_38], %27 {strides = array<i32>} : memref<32x384xf32, #tpu.memory_space<vmem>>, vector<3x384xf32>,
    %c0_39 = arith.constant 0 : index
    %c0_40 = arith.constant 0 : index
    %29 = vector.load %arg2[%c0_39, %c0_40] : memref<8x32xf32, #tpu.memory_space<vmem>>, vector<8x32xf32>
    %c0_41 = arith.constant 0 : index
    %c0_42 = arith.constant 0 : index
    %30 = vector.load %arg6[%c0_41, %c0_42] : memref<32x384xf32, #tpu.memory_space<vmem>>, vector<32x384xf32>
    %cst_43 = arith.constant dense<0.000000e+00> : vector<8x384xf32>
    %31 = tpu.matmul %29, %30, %cst_43 {dimension_numbers = #tpu.dot_dimension_numbers<[1], [0], [0], [1], [0, 0, 1, 1], [], []>} : vector<8x32xf32>, vector<32x384xf32>, vector<8x384xf32> -> vector<8x384xf32>
    %c0_44 = arith.constant 0 : index
    %c0_45 = arith.constant 0 : index
    %32 = vector.load %arg3[%c0_44, %c0_45] : memref<8x1xf32, #tpu.memory_space<vmem>>, vector<8x1xf32>
    %33 = vector.broadcast %32 : vector<8x1xf32> to vector<8x384xf32>
    %34 = arith.addf %31, %33 : vector<8x384xf32>
    %cst_46 = arith.constant 1.000000e-01 : f32
    %35 = vector.broadcast %cst_46 : f32 to vector<8x384xf32>
    %36 = arith.mulf %34, %35 : vector<8x384xf32>
    %37 = arith.maximumf %34, %36 : vector<8x384xf32>
    %c0_47 = arith.constant 0 : index
    %c0_48 = arith.constant 0 : index
    %c0_49 = arith.constant 0 : index
    %38 = vector.load %arg5[%c0_47, %c0_48, %c0_49] : memref<1x8x384xf32, #tpu.memory_space<vmem>>, vector<1x8x384xf32>
    %39 = vector.shape_cast %38 : vector<1x8x384xf32> to vector<8x384xf32>
    %40 = vector.shape_cast %37 : vector<8x384xf32> to vector<1x8x384xf32>
    tpu.vector_store %arg5[%c0_47, %c0_48, %c0_49], %40 {strides = array<i32>} : memref<1x8x384xf32, #tpu.memory_space<vmem>>, vector<1x8x384xf32>,
    return
  }
  func.func @transform_0(%arg0: i32, %arg1: i32) -> (i32, i32) {
    %c0_i32 = arith.constant 0 : i32
    %c0_i32_0 = arith.constant 0 : i32
    %c0_i32_1 = arith.constant 0 : i32
    return %c0_i32, %c0_i32_0 : i32, i32
  }
  func.func @transform_1(%arg0: i32, %arg1: i32) -> (i32, i32) {
    %c0_i32 = arith.constant 0 : i32
    %c0_i32_0 = arith.constant 0 : i32
    %c0_i32_1 = arith.constant 0 : i32
    return %c0_i32, %c0_i32_0 : i32, i32
  }
  func.func @transform_2(%arg0: i32, %arg1: i32) -> (i32, i32, i32, i32) {
    %c0_i32 = arith.constant 0 : i32
    %c0_i32_0 = arith.constant 0 : i32
    %c0_i32_1 = arith.constant 0 : i32
    return %arg0, %arg1, %c0_i32, %c0_i32_0 : i32, i32, i32, i32
  }
  func.func @transform_3(%arg0: i32, %arg1: i32) -> (i32, i32, i32) {
    %c0_i32 = arith.constant 0 : i32
    %c0_i32_0 = arith.constant 0 : i32
    return %arg0, %c0_i32, %arg1 : i32, i32, i32
  }
}

</mosaic_0001>

<llo_original>
// kernel: tpu_custom_call.1
$region0: #{tpu_custom_call.1}
  #allocation0 [shape = 'u32[]', space=smem, size = 0x4, offset = 0x4, fixed_abs, tag = 'smem constant byte address 0x4 - core index']
  #allocation1 [shape = 'u32[144,128]{1,0:T(1,128)}', space=vmem, size = 0x12000, scoped, tag = 'internal scratch']
  #allocation2 [shape = 'f32[32,384]{1,0:T(8,128)}', space=vmem, size = 0xc000, scoped, tag = 'scratch operand']
  %s0 = inlined_call_operand.vmem [shape: f32[8,32], index: 0, kind: input, shape index: {}]
  %s1 = inlined_call_operand.vmem [shape: f32[8,1], index: 1, kind: input, shape index: {}]
  %s2 = inlined_call_operand.vmem [shape: f32[2,1,3,422], index: 2, kind: input, shape index: {}]
  %s3 = inlined_call_operand.hbm [shape: f32[2,8,384], index: 3, kind: output, shape index: {}]
  %s4 = sld [smem:[#allocation0]]
  $region45: #{tpu_custom_call.1} parent=0
    _
  %s6 = ssub.s32 1, %s4
  %s7 = scalar_select 0, %s6, %s4
  $region1: #{tpu_custom_call.1} parent=0
    #allocation3 [shape = 'u8[24576]{0}', space=vmem, size = 0x6000, scoped, tag = 'output window, operand 0']
    #allocation4 [shape = 's32[2]{0}', space=sflag, size = 0x8, scoped, tag = 'scoped memory for tpu_custom_call.1']
    %8 = vsyncpa [#allocation4], 0
    %s9 = scalar_lea.sflag [#allocation4], 1
    %10 = vsyncpa %s9, 0
    loop: start=0, step=1, limit=4
    $region2: #{tpu_custom_call.1} parent=1 // loop_pre_header
      _
    $region3: #{tpu_custom_call.1} parent=1 // loop_header
      %s12 = sphi 0, %s16
      %p13 = scmp.ge.s32.totalorder %s12, 4
      %s19 = sphi 0, %s31
      %s20 = sphi 0, %s27
      %s21 = sphi 0, %s19
      %s22 = sphi 0, %s20
      %s23 = sphi 0, %s21
      %s24 = sphi 0, %s22
      %s32 = sphi 0, %s32
      %s34 = sphi 0, %s32
      %s35 = sphi 0, %s34
      %s49 = sphi 0, %s35
      %s53 = sphi 0, %s53
      %s55 = sphi 0, %s53
      %s56 = sphi 0, %s55
      %s70 = sphi 0, %s56
      %s78 = sphi 0, %s80
      %s81 = sphi 0, %s78
      %s82 = sphi 0, %s81
      %s98 = sphi 0, %s82
      %s106 = sphi 0, %s108
      %s109 = sphi 0, %s106
      %s110 = sphi 0, %s109
      %s126 = sphi 0, %s110
    $region4: #{tpu_custom_call.1} parent=1 // loop_header_branch
      %15 = sbr.rel (%p13) target = $region8
    $region5: #{tpu_custom_call.1} parent=1 // loop_body
      %s17 = ssub.s32 %s12, 1
      %s18 = ssub.s32 %s12, 2
      %s25 = sadd.s32 1, %s20
      %p26 = scmp.ge.s32.totalorder %s25, 1
      %s27 = scalar_select %p26, 0, %s25
      %s28 = sadd.s32 1, %s19
      %s29 = scalar_select %p26, %s28, %s19
      %p30 = scmp.ge.s32.totalorder %s29, 2
      %s31 = scalar_select %p30, 0, %s29
      %s33 = sadd.s32 %s32, 1
      %p36 = scmp.eq.s32.totalorder %s12, 1
      %p37 = scmp.ne.s32.totalorder %s32, %s34
      %p38 = scmp.eq.s32.totalorder %s12, 0
      %p39 = por %p37, %p38
      %p40 = scmp.ne.s32.totalorder %s32, %s34
      %p41 = scmp.eq.s32.totalorder %s17, 1
      %p42 = por %p40, %p41
      %p43 = scmp.ne.s32.totalorder %s34, %s35
      %p44 = scmp.eq.s32.totalorder %s17, 0
      %p45 = por %p43, %p44
      %p46 = scmp.ne.s32.totalorder %s34, %s35
      %p47 = scmp.eq.s32.totalorder %s18, 1
      %p48 = por %p46, %p47
      %p50 = scmp.ne.s32.totalorder %s35, %s49
      %p51 = scmp.eq.s32.totalorder %s18, 0
      %p52 = por %p50, %p51
      %s54 = sadd.s32 %s53, 1
      %p57 = scmp.eq.s32.totalorder %s12, 1
      %p58 = scmp.ne.s32.totalorder %s53, %s55
      %p59 = scmp.eq.s32.totalorder %s12, 0
      %p60 = por %p58, %p59
      %p61 = scmp.ne.s32.totalorder %s53, %s55
      %p62 = scmp.eq.s32.totalorder %s17, 1
      %p63 = por %p61, %p62
      %p64 = scmp.ne.s32.totalorder %s55, %s56
      %p65 = scmp.eq.s32.totalorder %s17, 0
      %p66 = por %p64, %p65
      %p67 = scmp.ne.s32.totalorder %s55, %s56
      %p68 = scmp.eq.s32.totalorder %s18, 1
      %p69 = por %p67, %p68
      %p71 = scmp.ne.s32.totalorder %s56, %s70
      %p72 = scmp.eq.s32.totalorder %s18, 0
      %p73 = por %p71, %p72
      %s74 = ssub.s32 %s19, %s31
      %s75 = ssub.s32 %s20, %s27
      %s76 = sor.u32 %s74, %s75
      %p77 = scmp.eq.s32.totalorder %s76, 0
      %s79 = sadd.s32 %s78, 1
      %s80 = scalar_select %p77, %s78, %s79
      %p83 = pneg %p77
      %p84 = scmp.eq.s32.totalorder %s12, 1
      %p85 = por %p83, %p84
      %p86 = scmp.ne.s32.totalorder %s78, %s81
      %p87 = scmp.eq.s32.totalorder %s12, 0
      %p88 = por %p86, %p87
      %p89 = scmp.ne.s32.totalorder %s78, %s81
      %p90 = scmp.eq.s32.totalorder %s17, 1
      %p91 = por %p89, %p90
      %p92 = scmp.ne.s32.totalorder %s81, %s82
      %p93 = scmp.eq.s32.totalorder %s17, 0
      %p94 = por %p92, %p93
      %p95 = scmp.ne.s32.totalorder %s81, %s82
      %p96 = scmp.eq.s32.totalorder %s18, 1
      %p97 = por %p95, %p96
      %p99 = scmp.ne.s32.totalorder %s82, %s98
      %p100 = scmp.eq.s32.totalorder %s18, 0
      %p101 = por %p99, %p100
      %s102 = ssub.s32 %s19, %s31
      %s103 = ssub.s32 %s20, %s27
      %s104 = sor.u32 %s102, %s103
      %p105 = scmp.eq.s32.totalorder %s104, 0
      %s107 = sadd.s32 %s106, 1
      %s108 = scalar_select %p105, %s106, %s107
      %p111 = pneg %p105
      %p112 = scmp.eq.s32.totalorder %s12, 1
      %p113 = por %p111, %p112
      %p114 = scmp.ne.s32.totalorder %s106, %s109
      %p115 = scmp.eq.s32.totalorder %s12, 0
      %p116 = por %p114, %p115
      %p117 = scmp.ne.s32.totalorder %s106, %s109
      %p118 = scmp.eq.s32.totalorder %s17, 1
      %p119 = por %p117, %p118
      %p120 = scmp.ne.s32.totalorder %s109, %s110
      %p121 = scmp.eq.s32.totalorder %s17, 0
      %p122 = por %p120, %p121
      %p123 = scmp.ne.s32.totalorder %s109, %s110
      %p124 = scmp.eq.s32.totalorder %s18, 1
      %p125 = por %p123, %p124
      %p127 = scmp.ne.s32.totalorder %s110, %s126
      %p128 = scmp.eq.s32.totalorder %s18, 0
      %p129 = por %p127, %p128
      %p130 = scmp.le.s32.totalorder 1, %s12
      %p131 = scmp.lt.s32.totalorder %s12, 3
      %p132 = pnand %p130, %p131
      %p133 = pneg %p132
      // Predicated region
      $region9: #{tpu_custom_call.1} parent=5 // pred_check
        _
      $region10: #{tpu_custom_call.1} parent=5 // pred_check_branch
        %135 = sbr.rel (%p132) target = $region12
      $region11: #{tpu_custom_call.1} parent=5 // pred_region
        %s136 = ssub.s32 %s12, 1
        // Predicated region
        $region13: #{tpu_custom_call.1} parent=11 // pred_check
          %p137 = pneg %p45
        $region14: #{tpu_custom_call.1} parent=11 // pred_check_branch
          %139 = sbr.rel (%p137) target = $region16
        $region15: #{tpu_custom_call.1} parent=11 // pred_region
          _
        $region16: #{tpu_custom_call.1} parent=11 // pred_fallthru
          _
        // Predicated region
        $region17: #{tpu_custom_call.1} parent=11 // pred_check
          %p140 = pneg %p66
        $region18: #{tpu_custom_call.1} parent=11 // pred_check_branch
          %142 = sbr.rel (%p140) target = $region20
        $region19: #{tpu_custom_call.1} parent=11 // pred_region
          _
        $region20: #{tpu_custom_call.1} parent=11 // pred_fallthru
          _
      $region12: #{tpu_custom_call.1} parent=5 // pred_fallthru
        _
      %p143 = scmp.lt.s32.totalorder %s12, 2
      // Predicated region
      $region21: #{tpu_custom_call.1} parent=5 // pred_check
        %p144 = pneg %p143
      $region22: #{tpu_custom_call.1} parent=5 // pred_check_branch
        %146 = sbr.rel (%p144) target = $region24
      $region23: #{tpu_custom_call.1} parent=5 // pred_region
        // Predicated region
        $region25: #{tpu_custom_call.1} parent=23 // pred_check
          %p147 = pneg %p88
        $region26: #{tpu_custom_call.1} parent=23 // pred_check_branch
          %149 = sbr.rel (%p147) target = $region28
        $region27: #{tpu_custom_call.1} parent=23 // pred_region
          %p150 = scmp.lt.s32.totalorder %s19, 1
          %s151 = scalar_select %p150, %s19, 1
          %p152 = scmp.lt.s32.totalorder %s20, 0
          %s153 = scalar_select %p152, %s20, 0
          %s154 = smul.addr %s153, 4
          %s155 = smul.addr %s151, 4
          %s156 = sadd.s32 %s154, %s155
          %s157 = smul.addr %s156, 4
          %s158 = scalar_lea.vmem %s2, %s157
        $region28: #{tpu_custom_call.1} parent=23 // pred_fallthru
          _
      $region24: #{tpu_custom_call.1} parent=5 // pred_fallthru
        _
      %p159 = scmp.le.s32.totalorder 1, %s12
      %p160 = scmp.lt.s32.totalorder %s12, 3
      %p161 = pnand %p159, %p160
      %p162 = pneg %p161
      // Predicated region
      $region29: #{tpu_custom_call.1} parent=5 // pred_check
        _
      $region30: #{tpu_custom_call.1} parent=5 // pred_check_branch
        %164 = sbr.rel (%p161) target = $region32
      $region31: #{tpu_custom_call.1} parent=5 // pred_region
        %s165 = ssub.s32 %s12, 1
        %p166 = pneg %p45
        %p167 = pneg %p42
        %p168 = pneg %p66
        %p169 = pneg %p63
        %p170 = scmp.lt.s32.totalorder %s21, 1
        %s171 = scalar_select %p170, %s21, 1
        %p172 = scmp.lt.s32.totalorder %s22, 0
        %s173 = scalar_select %p172, %s22, 0
        %s174 = smul.addr %s173, 4
        %s175 = smul.addr %s171, 4
        %s176 = sadd.s32 %s174, %s175
        %s177 = smul.addr %s176, 4
        %s178 = scalar_lea.vmem %s2, %s177
        %p179 = pneg %p94
        %p180 = pneg %p91
        %p181 = pneg %p122
        %p182 = pneg %p119
        %s183 = sand.u32 %s109, 1
        %s184 = scalar_lea.sflag [#allocation4], %s183
        %s185 = sand.u32 %s109, 1
        %s186 = smul.addr %s185, 24
        %s187 = scalar_lea.vmem [#allocation3], %s186
        %p188 = scmp.lt.s32.totalorder %s21, 1
        %s189 = scalar_select %p188, %s21, 1
        %p190 = scmp.lt.s32.totalorder %s22, 0
        %s191 = scalar_select %p190, %s22, 0
        %s192 = smul.addr %s191, 4
        %s193 = smul.addr %s189, 4
        %s194 = sadd.s32 %s192, %s193
        %s195 = smul.addr %s194, 4
        %s196 = scalar_lea.vmem %s2, %s195
        %s197 = smul.u32 3, %s22
        %198 = vst [vmem:[#allocation2 + $0x48] sm:$0xf8] 0.0
        %199 = vst [vmem:[#allocation2 + $0x50] sm:$0xf8] 0.0
        %200 = vst [vmem:[#allocation2 + $0x58] sm:$0xf8] 0.0
        %v201 = vld [vmem:[%s196] sm:$0x77]
        %v202 = vld [vmem:[%s196 + $0x8] sm:$0x7]
        %v204 = vcombine.high %v201, %v201
        %206 = vst [vmem:[#allocation2] sm:$0x7] %v201
        %207 = vst [vmem:[#allocation2 + $0x8] sm:$0x7] %v204
        %208 = vst [vmem:[#allocation2 + $0x10] sm:$0x7] %v202
        %v209 = vld [vmem:[%s196] sm:$0x77]
        %v210 = vld [vmem:[%s196 + $0x8] sm:$0x77]
        %v213 = vcombine.high %v209, %v209
        %v214 = vcombine.high %v210, %v210
        %v215 = vrot.slane %v209, 5
        %v216 = vrot.slane %v213, 5
        %v217 = vrot.slane %v210, 5
        %v218 = vrot.slane %v214, 5
        %219 = vrot.lane.b32.xlu0 %v215, 127
        %v220 = vpop.permute.xlu0 %219
        %221 = vrot.lane.b32.xlu0 %v216, 127
        %v222 = vpop.permute.xlu0 %221
        %223 = vrot.lane.b32.xlu0 %v217, 127
        %v224 = vpop.permute.xlu0 %223
        %225 = vrot.lane.b32.xlu0 %v218, 127
        %v226 = vpop.permute.xlu0 %225
        %vm227 = vcmask 1039360
        %v228 = vsel %vm227, %v220, %v222
        %v229 = vsel %vm227, %v222, %v224
        %v230 = vsel %vm227, %v224, %v226
        %234 = vst [vmem:[#allocation2] sm:$0x38] %v228
        %235 = vst [vmem:[#allocation2 + $0x8] sm:$0x38] %v229
        %236 = vst [vmem:[#allocation2 + $0x10] sm:$0x38] %v230
        %v237 = vld [vmem:[%s196] sm:$0x77]
        %v238 = vld [vmem:[%s196 + $0x8] sm:$0x77]
        %v241 = vcombine.high %v237, %v237
        %v242 = vcombine.high %v238, %v238
        %v243 = vrot.slane %v237, 2
        %v244 = vrot.slane %v241, 2
        %v245 = vrot.slane %v238, 2
        %v246 = vrot.slane %v242, 2
        %247 = vrot.lane.b32.xlu0 %v243, 126
        %v248 = vpop.permute.xlu0 %247
        %249 = vrot.lane.b32.xlu0 %v244, 126
        %v250 = vpop.permute.xlu0 %249
        %251 = vrot.lane.b32.xlu0 %v245, 126
        %v252 = vpop.permute.xlu0 %251
        %253 = vrot.lane.b32.xlu0 %v246, 126
        %v254 = vpop.permute.xlu0 %253
        %vm255 = vcmask 1031168
        %v256 = vsel %vm255, %v248, %v250
        %v257 = vsel %vm255, %v250, %v252
        %v258 = vsel %vm255, %v252, %v254
        %262 = vst [vmem:[#allocation2] sm:$0xc0] %v256
        %263 = vst [vmem:[#allocation2 + $0x8] sm:$0xc0] %v257
        %264 = vst [vmem:[#allocation2 + $0x10] sm:$0xc0] %v258
        %265 = vst [vmem:[#allocation2 + $0x18] sm:$0x1] %v256
        %266 = vst [vmem:[#allocation2 + $0x20] sm:$0x1] %v257
        %267 = vst [vmem:[#allocation2 + $0x28] sm:$0x1] %v258
        %v268 = vld [vmem:[%s196] sm:$0x77]
        %v269 = vld [vmem:[%s196 + $0x8] sm:$0x77]
        %v272 = vcombine.high %v268, %v268
        %v273 = vcombine.high %v269, %v269
        %v274 = vrot.slane %v268, 7
        %v275 = vrot.slane %v272, 7
        %v276 = vrot.slane %v269, 7
        %v277 = vrot.slane %v273, 7
        %278 = vrot.lane.b32.xlu0 %v274, 110
        %v279 = vpop.permute.xlu0 %278
        %280 = vrot.lane.b32.xlu0 %v275, 110
        %v281 = vpop.permute.xlu0 %280
        %282 = vrot.lane.b32.xlu0 %v276, 110
        %v283 = vpop.permute.xlu0 %282
        %284 = vrot.lane.b32.xlu0 %v277, 110
        %v285 = vpop.permute.xlu0 %284
        %vm286 = vcmask 900096
        %v287 = vsel %vm286, %v279, %v281
        %v288 = vsel %vm286, %v281, %v283
        %v289 = vsel %vm286, %v283, %v285
        %293 = vst [vmem:[#allocation2 + $0x18] sm:$0xe] %v287
        %294 = vst [vmem:[#allocation2 + $0x20] sm:$0xe] %v288
        %295 = vst [vmem:[#allocation2 + $0x28] sm:$0xe] %v289
        %v296 = vld [vmem:[%s196] sm:$0x77]
        %v297 = vld [vmem:[%s196 + $0x8] sm:$0x77]
        %v300 = vcombine.low %v296, %v296
        %v301 = vcombine.low %v297, %v297
        %302 = vrot.lane.b32.xlu0 %v300, 109
        %v303 = vpop.permute.xlu0 %302
        %304 = vrot.lane.b32.xlu0 %v296, 109
        %v305 = vpop.permute.xlu0 %304
        %306 = vrot.lane.b32.xlu0 %v301, 109
        %v307 = vpop.permute.xlu0 %306
        %308 = vrot.lane.b32.xlu0 %v297, 109
        %v309 = vpop.permute.xlu0 %308
        %vm310 = vcmask 891904
        %v311 = vsel %vm310, %v303, %v305
        %v312 = vsel %vm310, %v305, %v307
        %v313 = vsel %vm310, %v307, %v309
        %317 = vst [vmem:[#allocation2 + $0x18] sm:$0x70] %v311
        %318 = vst [vmem:[#allocation2 + $0x20] sm:$0x70] %v312
        %319 = vst [vmem:[#allocation2 + $0x28] sm:$0x70] %v313
        %v320 = vld [vmem:[%s196] sm:$0x77]
        %v321 = vld [vmem:[%s196 + $0x8] sm:$0x77]
        %v324 = vcombine.high %v320, %v320
        %v325 = vcombine.high %v321, %v321
        %v326 = vrot.slane %v320, 1
        %v327 = vrot.slane %v324, 1
        %v328 = vrot.slane %v321, 1
        %v329 = vrot.slane %v325, 1
        %330 = vrot.lane.b32.xlu0 %v326, 108
        %v331 = vpop.permute.xlu0 %330
        %332 = vrot.lane.b32.xlu0 %v327, 108
        %v333 = vpop.permute.xlu0 %332
        %334 = vrot.lane.b32.xlu0 %v328, 108
        %v335 = vpop.permute.xlu0 %334
        %336 = vrot.lane.b32.xlu0 %v329, 108
        %v337 = vpop.permute.xlu0 %336
        %vm338 = vcmask 883712
        %v339 = vsel %vm338, %v331, %v333
        %v340 = vsel %vm338, %v333, %v335
        %v341 = vsel %vm338, %v335, %v337
        %345 = vst [vmem:[#allocation2 + $0x18] sm:$0x80] %v339
        %346 = vst [vmem:[#allocation2 + $0x20] sm:$0x80] %v340
        %347 = vst [vmem:[#allocation2 + $0x28] sm:$0x80] %v341
        %348 = vst [vmem:[#allocation2 + $0x30] sm:$0x3] %v339
        %349 = vst [vmem:[#allocation2 + $0x38] sm:$0x3] %v340
        %350 = vst [vmem:[#allocation2 + $0x40] sm:$0x3] %v341
        %v351 = vld [vmem:[%s196] sm:$0x77]
        %v352 = vld [vmem:[%s196 + $0x8] sm:$0x77]
        %v355 = vcombine.high %v351, %v351
        %v356 = vcombine.high %v352, %v352
        %v357 = vrot.slane %v351, 6
        %v358 = vrot.slane %v355, 6
        %v359 = vrot.slane %v352, 6
        %v360 = vrot.slane %v356, 6
        %361 = vrot.lane.b32.xlu0 %v357, 92
        %v362 = vpop.permute.xlu0 %361
        %363 = vrot.lane.b32.xlu0 %v358, 92
        %v364 = vpop.permute.xlu0 %363
        %365 = vrot.lane.b32.xlu0 %v359, 92
        %v366 = vpop.permute.xlu0 %365
        %367 = vrot.lane.b32.xlu0 %v360, 92
        %v368 = vpop.permute.xlu0 %367
        %vm369 = vcmask 752640
        %v370 = vsel %vm369, %v362, %v364
        %v371 = vsel %vm369, %v364, %v366
        %v372 = vsel %vm369, %v366, %v368
        %376 = vst [vmem:[#allocation2 + $0x30] sm:$0x1c] %v370
        %377 = vst [vmem:[#allocation2 + $0x38] sm:$0x1c] %v371
        %378 = vst [vmem:[#allocation2 + $0x40] sm:$0x1c] %v372
        %v379 = vld [vmem:[%s196] sm:$0x77]
        %v380 = vld [vmem:[%s196 + $0x8] sm:$0x77]
        %v383 = vcombine.high %v379, %v379
        %v384 = vcombine.high %v380, %v380
        %v385 = vrot.slane %v379, 3
        %v386 = vrot.slane %v383, 3
        %v387 = vrot.slane %v380, 3
        %v388 = vrot.slane %v384, 3
        %389 = vrot.lane.b32.xlu0 %v385, 91
        %v390 = vpop.permute.xlu0 %389
        %391 = vrot.lane.b32.xlu0 %v386, 91
        %v392 = vpop.permute.xlu0 %391
        %393 = vrot.lane.b32.xlu0 %v387, 91
        %v394 = vpop.permute.xlu0 %393
        %395 = vrot.lane.b32.xlu0 %v388, 91
        %v396 = vpop.permute.xlu0 %395
        %vm397 = vcmask 744448
        %v398 = vsel %vm397, %v390, %v392
        %v399 = vsel %vm397, %v392, %v394
        %v400 = vsel %vm397, %v394, %v396
        %404 = vst [vmem:[#allocation2 + $0x30] sm:$0xe0] %v398
        %405 = vst [vmem:[#allocation2 + $0x38] sm:$0xe0] %v399
        %406 = vst [vmem:[#allocation2 + $0x40] sm:$0xe0] %v400
        %v407 = vld [vmem:[%s196] sm:$0x77]
        %v408 = vld [vmem:[%s196 + $0x8] sm:$0x77]
        %v411 = vcombine.high %v407, %v407
        %v412 = vcombine.high %v408, %v408
        %413 = vrot.lane.b32.xlu0 %v407, 90
        %v414 = vpop.permute.xlu0 %413
        %415 = vrot.lane.b32.xlu0 %v411, 90
        %v416 = vpop.permute.xlu0 %415
        %417 = vrot.lane.b32.xlu0 %v408, 90
        %v418 = vpop.permute.xlu0 %417
        %419 = vrot.lane.b32.xlu0 %v412, 90
        %v420 = vpop.permute.xlu0 %419
        %vm421 = vcmask 736256
        %v422 = vsel %vm421, %v414, %v416
        %v423 = vsel %vm421, %v416, %v418
        %v424 = vsel %vm421, %v418, %v420
        %428 = vst [vmem:[#allocation2 + $0x48] sm:$0x7] %v422
        %429 = vst [vmem:[#allocation2 + $0x50] sm:$0x7] %v423
        %430 = vst [vmem:[#allocation2 + $0x58] sm:$0x7] %v424
        %v431 = vld [vmem:[%s0] sm:$0xff]
        %v432 = vld [vmem:[#allocation2] sm:$0xff]
        %v433 = vld [vmem:[#allocation2 + $0x8] sm:$0xff]
        %v434 = vld [vmem:[#allocation2 + $0x10] sm:$0xff]
        %v435 = vld [vmem:[#allocation2 + $0x18] sm:$0xff]
        %v436 = vld [vmem:[#allocation2 + $0x20] sm:$0xff]
        %v437 = vld [vmem:[#allocation2 + $0x28] sm:$0xff]
        %v438 = vld [vmem:[#allocation2 + $0x30] sm:$0xff]
        %v439 = vld [vmem:[#allocation2 + $0x38] sm:$0xff]
        %v440 = vld [vmem:[#allocation2 + $0x40] sm:$0xff]
        %v441 = vld [vmem:[#allocation2 + $0x48] sm:$0xff]
        %v442 = vld [vmem:[#allocation2 + $0x50] sm:$0xff]
        %v443 = vld [vmem:[#allocation2 + $0x58] sm:$0xff]
        %v444 = vld [vmem:[%s1] sm:$0xff]
        %446 = vset.pattern.permute.xlu0 0
        %447 = vperm.xlu0 %446, %v444
        %v448 = vpop.permute.xlu0 %447
        %vm450 = vcmask 261120
        %v452 = vsel %vm450, %v431, 0
        %454 = vmatprep.subr.mxu0 0.0
        %455 = vmatpush1.msra.mxu0 0.0
        %456 = vmatprep.subr.mxu0 0.0
        %457 = vmatpush1.msra.mxu0 0.0
        %458 = vmatprep.subr.mxu0 0.0
        %459 = vmatpush1.msra.mxu0 0.0
        %460 = vmatprep.subr.mxu0 0.0
        %461 = vmatpush1.msra.mxu0 0.0
        %462 = vmatprep.subr.mxu0 0.0
        %463 = vmatpush1.msra.mxu0 0.0
        %464 = vmatprep.subr.mxu0 0.0
        %465 = vmatpush1.msra.mxu0 0.0
        %466 = vmatprep.subr.mxu0 0.0
        %467 = vmatpush1.msra.mxu0 0.0
        %468 = vmatprep.subr.mxu0 0.0
        %469 = vmatpush1.msra.mxu0 0.0
        %470 = vmatprep.subr.mxu0 0.0
        %471 = vmatpush1.msra.mxu0 0.0
        %472 = vmatprep.subr.mxu0 0.0
        %473 = vmatpush1.msra.mxu0 0.0
        %474 = vmatprep.subr.mxu0 0.0
        %475 = vmatpush1.msra.mxu0 0.0
        %476 = vmatprep.subr.mxu0 0.0
        %477 = vmatpush1.msra.mxu0 0.0
        %478 = vmatprep.subr.mxu0 %v442
        %479 = vmatpush1.msra.mxu0 %v441
        %480 = vmatprep.subr.mxu0 %v439
        %481 = vmatpush1.msra.mxu0 %v438
        %482 = vmatprep.subr.mxu0 %v436
        %483 = vmatpush1.msra.mxu0 %v435
        %484 = vmatprep.subr.mxu0 %v433
        %485 = vmatpush1.msra.mxu0 %v432
        %486 = vmatprep.subr.mxu0 0.0
        %487 = vmatpush2.msra.mxu0 0.0
        %488 = vmatprep.subr.mxu0 0.0
        %489 = vmatpush2.msra.mxu0 0.0
        %490 = vmatprep.subr.mxu0 0.0
        %491 = vmatpush2.msra.mxu0 0.0
        %492 = vmatprep.subr.mxu0 0.0
        %493 = vmatpush2.msra.mxu0 0.0
        %494 = vmatprep.subr.mxu0 0.0
        %495 = vmatpush2.msra.mxu0 0.0
        %496 = vmatprep.subr.mxu0 0.0
        %497 = vmatpush2.msra.mxu0 0.0
        %498 = vmatprep.subr.mxu0 0.0
        %499 = vmatpush2.msra.mxu0 0.0
        %500 = vmatprep.subr.mxu0 0.0
        %501 = vmatpush2.msra.mxu0 0.0
        %502 = vmatprep.subr.mxu0 0.0
        %503 = vmatpush2.msra.mxu0 0.0
        %504 = vmatprep.subr.mxu0 0.0
        %505 = vmatpush2.msra.mxu0 0.0
        %506 = vmatprep.subr.mxu0 0.0
        %507 = vmatpush2.msra.mxu0 0.0
        %508 = vmatprep.subr.mxu0 0.0
        %509 = vmatpush2.msra.mxu0 0.0
        %510 = vmatprep.subr.mxu0 0.0
        %511 = vmatpush2.msra.mxu0 0.0
        %512 = vmatprep.subr.mxu0 0.0
        %513 = vmatpush2.msra.mxu0 0.0
        %514 = vmatprep.subr.mxu0 0.0
        %515 = vmatpush2.msra.mxu0 0.0
        %516 = vmatprep.subr.mxu0 0.0
        %517 = vmatpush2.msra.mxu0 0.0
        %518 = vmatprep.mubr.f32.mxu0 0.0
        %519 = vmatmul.mubr.f32.gmra.mxu0 %v452
        %v520 = vpop.f32.mrf.mxu0
        %v521 = vadd.f32 %v448, %v520
        %v522 = vpop.f32.mrf.mxu0
        %v523 = vadd.f32 %v448, %v522
        %524 = vdwg.mxu0
        %525 = vmatprep.subr.mxu0 0.0
        %526 = vmatpush1.msra.mxu0 0.0
        %527 = vmatprep.subr.mxu0 0.0
        %528 = vmatpush1.msra.mxu0 0.0
        %529 = vmatprep.subr.mxu0 0.0
        %530 = vmatpush1.msra.mxu0 0.0
        %531 = vmatprep.subr.mxu0 0.0
        %532 = vmatpush1.msra.mxu0 0.0
        %533 = vmatprep.subr.mxu0 0.0
        %534 = vmatpush1.msra.mxu0 0.0
        %535 = vmatprep.subr.mxu0 0.0
        %536 = vmatpush1.msra.mxu0 0.0
        %537 = vmatprep.subr.mxu0 0.0
        %538 = vmatpush1.msra.mxu0 0.0
        %539 = vmatprep.subr.mxu0 0.0
        %540 = vmatpush1.msra.mxu0 0.0
        %541 = vmatprep.subr.mxu0 0.0
        %542 = vmatpush1.msra.mxu0 0.0
        %543 = vmatprep.subr.mxu0 0.0
        %544 = vmatpush1.msra.mxu0 0.0
        %545 = vmatprep.subr.mxu0 0.0
        %546 = vmatpush1.msra.mxu0 0.0
        %547 = vmatprep.subr.mxu0 0.0
        %548 = vmatpush1.msra.mxu0 0.0
        %549 = vmatprep.subr.mxu0 0.0
        %550 = vmatpush1.msra.mxu0 %v443
        %551 = vmatprep.subr.mxu0 0.0
        %552 = vmatpush1.msra.mxu0 %v440
        %553 = vmatprep.subr.mxu0 0.0
        %554 = vmatpush1.msra.mxu0 %v437
        %555 = vmatprep.subr.mxu0 0.0
        %556 = vmatpush1.msra.mxu0 %v434
        %557 = vmatprep.subr.mxu0 0.0
        %558 = vmatpush2.msra.mxu0 0.0
        %559 = vmatprep.subr.mxu0 0.0
        %560 = vmatpush2.msra.mxu0 0.0
        %561 = vmatprep.subr.mxu0 0.0
        %562 = vmatpush2.msra.mxu0 0.0
        %563 = vmatprep.subr.mxu0 0.0
        %564 = vmatpush2.msra.mxu0 0.0
        %565 = vmatprep.subr.mxu0 0.0
        %566 = vmatpush2.msra.mxu0 0.0
        %567 = vmatprep.subr.mxu0 0.0
        %568 = vmatpush2.msra.mxu0 0.0
        %569 = vmatprep.subr.mxu0 0.0
        %570 = vmatpush2.msra.mxu0 0.0
        %571 = vmatprep.subr.mxu0 0.0
        %572 = vmatpush2.msra.mxu0 0.0
        %573 = vmatprep.subr.mxu0 0.0
        %574 = vmatpush2.msra.mxu0 0.0
        %575 = vmatprep.subr.mxu0 0.0
        %576 = vmatpush2.msra.mxu0 0.0
        %577 = vmatprep.subr.mxu0 0.0
        %578 = vmatpush2.msra.mxu0 0.0
        %579 = vmatprep.subr.mxu0 0.0
        %580 = vmatpush2.msra.mxu0 0.0
        %581 = vmatprep.subr.mxu0 0.0
        %582 = vmatpush2.msra.mxu0 0.0
        %583 = vmatprep.subr.mxu0 0.0
        %584 = vmatpush2.msra.mxu0 0.0
        %585 = vmatprep.subr.mxu0 0.0
        %586 = vmatpush2.msra.mxu0 0.0
        %587 = vmatprep.subr.mxu0 0.0
        %588 = vmatpush2.msra.mxu0 0.0
        %589 = vmatprep.mubr.f32.mxu0 0.0
        %590 = vmatmul.mubr.f32.gmra.mxu0 %v452
        %v591 = vpop.f32.mrf.mxu0
        %v592 = vadd.f32 %v448, %v591
        %v593 = vpop.f32.mrf.mxu0
        %594 = vdwg.mxu0
        %v595 = vmul.f32 %v521, 0.1
        %v596 = vmul.f32 %v523, 0.1
        %v597 = vmul.f32 %v592, 0.1
        %v598 = vmax.f32 %v521, %v595
        %v599 = vmax.f32 %v523, %v596
        %v600 = vmax.f32 %v592, %v597
        %601 = vst [vmem:[%s187] sm:$0xff] %v598
        %602 = vst [vmem:[%s187 + $0x8] sm:$0xff] %v599
        %603 = vst [vmem:[%s187 + $0x10] sm:$0xff] %v600
        %s604 = sand.u32 %s109, 1
        %s605 = scalar_lea.sflag [#allocation4], %s604
        %s606 = sand.u32 %s109, 1
        %s607 = smul.addr %s606, 24
        %s608 = scalar_lea.vmem [#allocation3], %s607
        // Predicated region
        $region33: #{tpu_custom_call.1} parent=31 // pred_check
          %p609 = pneg %p119
        $region34: #{tpu_custom_call.1} parent=31 // pred_check_branch
          %611 = sbr.rel (%p609) target = $region36
        $region35: #{tpu_custom_call.1} parent=31 // pred_region
          %s612 = smul.u32 3, %s22
          %s614 = ssub.s32 384, 384
          %615 = vsyncadd %s605, %s614
          %s616 = smul.addr %s21, 3
          %s617 = sadd.s32 %s612, %s616
          %s618 = smul.addr %s617, 128
          %s619 = scalar_lea.hbm %s3, %s618
          %s621 = sshll.u32 %s608, 4
          %s622 = int_to_ptr.vmem [resolvable:$true] %s621
          %624 = dma.vmem_to_hbm [thread:$0]  %s622, 384, %s619, %s605
        $region36: #{tpu_custom_call.1} parent=31 // pred_fallthru
          _
      $region32: #{tpu_custom_call.1} parent=5 // pred_fallthru
        _
      %p625 = scmp.le.s32.totalorder 2, %s12
      // Predicated region
      $region37: #{tpu_custom_call.1} parent=5 // pred_check
        %p626 = pneg %p625
      $region38: #{tpu_custom_call.1} parent=5 // pred_check_branch
        %628 = sbr.rel (%p626) target = $region40
      $region39: #{tpu_custom_call.1} parent=5 // pred_region
        %s629 = ssub.s32 %s12, 2
        // Predicated region
        $region41: #{tpu_custom_call.1} parent=39 // pred_check
          %p630 = pneg %p125
        $region42: #{tpu_custom_call.1} parent=39 // pred_check_branch
          %632 = sbr.rel (%p630) target = $region44
        $region43: #{tpu_custom_call.1} parent=39 // pred_region
          %s633 = sand.u32 %s110, 1
          %s634 = scalar_lea.sflag [#allocation4], %s633
          %s635 = sand.u32 %s110, 1
          %s636 = smul.addr %s635, 24
          %s637 = scalar_lea.vmem [#allocation3], %s636
          %638 = dma.done %s634, 384
        $region44: #{tpu_custom_call.1} parent=39 // pred_fallthru
          _
      $region40: #{tpu_custom_call.1} parent=5 // pred_fallthru
        _
    $region6: #{tpu_custom_call.1} parent=1 // loop_footer
      %s16 = sadd.s32 1, %s12
    $region7: #{tpu_custom_call.1} parent=1 // loop_footer_branch
      %11 = sbr.rel target = $region3
    $region8: #{tpu_custom_call.1} parent=1 // loop_exit
      _
    %639 = vsyncpa [#allocation4], 1
    %s640 = scalar_lea.sflag [#allocation4], 1
    %641 = vsyncpa %s640, 1

</llo_original>
